<compile_context>
chip_gen: v7x
topology: tpu7x:2x2x1
jax: 0.10.0
libtpu: 0.0.40
codegen_flags: <defaults>
</compile_context>

<pallas_src>
import jax
import jax.numpy as jnp
from jax.experimental import pallas as pl
from jax.experimental.pallas import tpu as pltpu

_MAX_BATCH_TILE = 2048   # rows per grid step; (2048, 8) f32 activation tile = 64 KiB
_SMALL_BATCH_JNP = 64    # below this, a fused XLA MLP beats any Pallas launch
_HIDDEN = 30


def _round_up(x: int, m: int) -> int:
    return (x + m - 1) // m * m


def _mlp_kernel(x_ref, w1_ref, b1_ref, w2_ref, b2_ref, out_ref):
    """One batch tile of relu(x @ W1 + b1) @ W2 + b2, f32 accumulation."""
    h = jnp.dot(x_ref[...], w1_ref[...], preferred_element_type=jnp.float32)
    h = jnp.maximum(h + b1_ref[...], 0.0)
    q = jnp.dot(h, w2_ref[...], preferred_element_type=jnp.float32) + b2_ref[...]
    out_ref[...] = q.astype(out_ref.dtype)


def _forward_ref(state, w1, b1, w2, b2):
    """Plain-JAX reference / small-batch fast path (same math as the module)."""
    h = jnp.maximum(state @ w1 + b1[None, :], 0.0)
    return h @ w2 + b2[None, :]


def network_forward(state, w1, b1, w2, b2, *,
                    batch_tile: int = _MAX_BATCH_TILE,
                    force_pallas: bool = False):
    """Q-network forward pass: relu(state @ w1 + b1) @ w2 + b2.

    state: (batch, input_size) f32
    w1:    (input_size, 30) f32      b1: (30,) f32
    w2:    (30, nb_action) f32       b2: (nb_action,) f32
    returns (batch, nb_action) f32
    """
    batch, input_size = state.shape
    hidden = w1.shape[1]
    nb_action = w2.shape[1]
    f32 = jnp.float32

    state = state.astype(f32)
    w1 = w1.astype(f32)
    w2 = w2.astype(f32)
    b1_r = b1.reshape(1, hidden).astype(f32)
    b2_r = b2.reshape(1, nb_action).astype(f32)

    # Tiny online-inference batches: pure launch/DMA overhead in a kernel.
    if not force_pallas and batch <= _SMALL_BATCH_JNP:
        return _forward_ref(state, w1, b1_r[0], w2, b2_r[0])

    # ---- balanced batch tiling ----------------------------------------------
    num_tiles = pl.cdiv(batch, batch_tile)
    if num_tiles == 1 and batch >= 16:
        # Ensure >= 2 grid steps so the "parallel" axis can shard across the
        # two TensorCores on v7x (harmless on single-TC v5e/v6e).
        num_tiles = 2
    tb = _round_up(pl.cdiv(batch, num_tiles), 8)   # rows/tile, multiple of 8
    batch_p = num_tiles * tb

    if batch_p != batch:
        x_p = jnp.zeros((batch_p, input_size), f32).at[:batch, :].set(state)
    else:
        x_p = state

    # ---- advisory cost estimate ----------------------------------------------
    flops = 2 * batch_p * input_size * hidden + 2 * batch_p * hidden * nb_action
    bytes_accessed = 4 * (batch_p * input_size + w1.size + w2.size
                          + b1_r.size + b2_r.size + batch_p * nb_action)

    out = pl.pallas_call(
        _mlp_kernel,
        out_shape=jax.ShapeDtypeStruct((batch_p, nb_action), f32),
        grid=(num_tiles,),
        in_specs=[
            # Batch-tiled activations: pipelined / double-buffered per grid step.
            pl.BlockSpec((tb, input_size), lambda i: (i, 0)),
            # Weights & biases: constant index maps -> loaded once, VMEM-resident.
            pl.BlockSpec((input_size, hidden), lambda i: (0, 0)),
            pl.BlockSpec((1, hidden), lambda i: (0, 0)),
            pl.BlockSpec((hidden, nb_action), lambda i: (0, 0)),
            pl.BlockSpec((1, nb_action), lambda i: (0, 0)),
        ],
        out_specs=pl.BlockSpec((tb, nb_action), lambda i: (i, 0)),
        compiler_params=pltpu.CompilerParams(
            dimension_semantics=("parallel",),
        ),
        cost_estimate=pl.CostEstimate(
            flops=flops, transcendentals=0, bytes_accessed=bytes_accessed),
    )(x_p, w1, b1_r, w2, b2_r)

    return out[:batch] if batch_p != batch else out


def init_network_params(key, input_size, nb_action, hidden=_HIDDEN):
    """Deterministic init mimicking nn.Linear's uniform(-1/sqrt(fan_in)) scheme.

    Weights are stored as (in_features, out_features) for the x @ W layout.
    """
    k1, k2, k3, k4 = jax.random.split(key, 4)
    bound1 = 1.0 / jnp.sqrt(input_size)
    bound2 = 1.0 / jnp.sqrt(hidden)
    w1 = jax.random.uniform(k1, (input_size, hidden), jnp.float32, -bound1, bound1)
    b1 = jax.random.uniform(k2, (hidden,), jnp.float32, -bound1, bound1)
    w2 = jax.random.uniform(k3, (hidden, nb_action), jnp.float32, -bound2, bound2)
    b2 = jax.random.uniform(k4, (nb_action,), jnp.float32, -bound2, bound2)
    return w1, b1, w2, b2


if __name__ == "__main__":
    input_size = 8     # small state vector, as in the self-driving-car example
    nb_action = 4
    batch = 2

    key = jax.random.PRNGKey(0)
    pk, xk = jax.random.split(key)
    w1, b1, w2, b2 = init_network_params(pk, input_size, nb_action)
    state = jax.random.normal(xk, (batch, input_size), jnp.float32)

    # Small batch, forced through the Pallas kernel (exercises the kernel path).
    q_values = network_forward(state, w1, b1, w2, b2, force_pallas=True)
    q_values = jax.block_until_ready(q_values)
    ref = jnp.maximum(state @ w1 + b1[None, :], 0.0) @ w2 + b2[None, :]
    assert q_values.shape == (batch, nb_action)
    assert jnp.allclose(q_values, ref, atol=1e-5, rtol=1e-5)

    # Small batch via the auto-dispatch (plain-XLA) path.
    q_small = jax.block_until_ready(network_forward(state, w1, b1, w2, b2))
    assert jnp.allclose(q_small, ref, atol=1e-5, rtol=1e-5)

    # Large replay-buffer batch exercises the multi-tile (>= 2 grid steps) path.
    big = jax.random.normal(jax.random.PRNGKey(1), (1200, input_size), jnp.float32)
    q_big = jax.block_until_ready(network_forward(big, w1, b1, w2, b2))
    ref_big = jnp.maximum(big @ w1 + b1[None, :], 0.0) @ w2 + b2[None, :]
    assert q_big.shape == (1200, nb_action)
    assert jnp.allclose(q_big, ref_big, atol=1e-4, rtol=1e-4)

    print("KERNEL_OK")
</pallas_src>

<mosaic_0001>
module attributes {stable_mosaic.version = 11 : i64} {
  func.func @_mlp_kernel(%arg0: i32, %arg1: memref<8x8xf32, #tpu.memory_space<vmem>>, %arg2: memref<8x30xf32, #tpu.memory_space<vmem>>, %arg3: memref<1x30xf32, #tpu.memory_space<vmem>>, %arg4: memref<30x4xf32, #tpu.memory_space<vmem>>, %arg5: memref<1x4xf32, #tpu.memory_space<vmem>>, %arg6: memref<8x4xf32, #tpu.memory_space<vmem>>) attributes {dimension_semantics = [#tpu.dimension_semantics<parallel>], iteration_bounds = array<i64: 1>, scalar_prefetch = 0 : i64, scratch_operands = 0 : i64, tpu.core_type = #tpu.core_type<tc>, window_params = [{transform_indices = @transform_0, window_bounds = array<i64: 8, 8>}, {pipeline_mode = #tpu.pipeline_mode<synchronous>, transform_indices = @transform_1, window_bounds = array<i64: 8, 30>}, {pipeline_mode = #tpu.pipeline_mode<synchronous>, transform_indices = @transform_2, window_bounds = array<i64: 1, 30>}, {pipeline_mode = #tpu.pipeline_mode<synchronous>, transform_indices = @transform_3, window_bounds = array<i64: 30, 4>}, {pipeline_mode = #tpu.pipeline_mode<synchronous>, transform_indices = @transform_4, window_bounds = array<i64: 1, 4>}, {transform_indices = @transform_5, window_bounds = array<i64: 8, 4>}]} {
    %c0 = arith.constant 0 : index
    %c0_0 = arith.constant 0 : index
    %0 = vector.load %arg1[%c0, %c0_0] : memref<8x8xf32, #tpu.memory_space<vmem>>, vector<8x8xf32>
    %c0_1 = arith.constant 0 : index
    %c0_2 = arith.constant 0 : index
    %1 = vector.load %arg2[%c0_1, %c0_2] : memref<8x30xf32, #tpu.memory_space<vmem>>, vector<8x30xf32>
    %cst = arith.constant dense<0.000000e+00> : vector<8x30xf32>
    %2 = tpu.matmul %0, %1, %cst {dimension_numbers = #tpu.dot_dimension_numbers<[1], [0], [0], [1], [0, 0, 1, 1], [], []>} : vector<8x8xf32>, vector<8x30xf32>, vector<8x30xf32> -> vector<8x30xf32>
    %c0_3 = arith.constant 0 : index
    %c0_4 = arith.constant 0 : index
    %3 = vector.load %arg3[%c0_3, %c0_4] : memref<1x30xf32, #tpu.memory_space<vmem>>, vector<1x30xf32>
    %4 = vector.broadcast %3 : vector<1x30xf32> to vector<8x30xf32>
    %5 = arith.addf %2, %4 : vector<8x30xf32>
    %cst_5 = arith.constant 0.000000e+00 : f32
    %6 = vector.broadcast %cst_5 : f32 to vector<8x30xf32>
    %7 = arith.maximumf %5, %6 : vector<8x30xf32>
    %c0_6 = arith.constant 0 : index
    %c0_7 = arith.constant 0 : index
    %8 = vector.load %arg4[%c0_6, %c0_7] : memref<30x4xf32, #tpu.memory_space<vmem>>, vector<30x4xf32>
    %cst_8 = arith.constant dense<0.000000e+00> : vector<8x4xf32>
    %9 = tpu.matmul %7, %8, %cst_8 {dimension_numbers = #tpu.dot_dimension_numbers<[1], [0], [0], [1], [0, 0, 1, 1], [], []>} : vector<8x30xf32>, vector<30x4xf32>, vector<8x4xf32> -> vector<8x4xf32>
    %c0_9 = arith.constant 0 : index
    %c0_10 = arith.constant 0 : index
    %10 = vector.load %arg5[%c0_9, %c0_10] : memref<1x4xf32, #tpu.memory_space<vmem>>, vector<1x4xf32>
    %11 = vector.broadcast %10 : vector<1x4xf32> to vector<8x4xf32>
    %12 = arith.addf %9, %11 : vector<8x4xf32>
    %c0_11 = arith.constant 0 : index
    %c0_12 = arith.constant 0 : index
    %13 = vector.load %arg6[%c0_11, %c0_12] : memref<8x4xf32, #tpu.memory_space<vmem>>, vector<8x4xf32>
    tpu.vector_store %arg6[%c0_11, %c0_12], %12 {strides = array<i32>} : memref<8x4xf32, #tpu.memory_space<vmem>>, vector<8x4xf32>,
    return
  }
  func.func @transform_0(%arg0: i32) -> (i32, i32) {
    %c0_i32 = arith.constant 0 : i32
    %c0_i32_0 = arith.constant 0 : i32
    return %arg0, %c0_i32 : i32, i32
  }
  func.func @transform_1(%arg0: i32) -> (i32, i32) {
    %c0_i32 = arith.constant 0 : i32
    %c0_i32_0 = arith.constant 0 : i32
    %c0_i32_1 = arith.constant 0 : i32
    return %c0_i32, %c0_i32_0 : i32, i32
  }
  func.func @transform_2(%arg0: i32) -> (i32, i32) {
    %c0_i32 = arith.constant 0 : i32
    %c0_i32_0 = arith.constant 0 : i32
    %c0_i32_1 = arith.constant 0 : i32
    return %c0_i32, %c0_i32_0 : i32, i32
  }
  func.func @transform_3(%arg0: i32) -> (i32, i32) {
    %c0_i32 = arith.constant 0 : i32
    %c0_i32_0 = arith.constant 0 : i32
    %c0_i32_1 = arith.constant 0 : i32
    return %c0_i32, %c0_i32_0 : i32, i32
  }
  func.func @transform_4(%arg0: i32) -> (i32, i32) {
    %c0_i32 = arith.constant 0 : i32
    %c0_i32_0 = arith.constant 0 : i32
    %c0_i32_1 = arith.constant 0 : i32
    return %c0_i32, %c0_i32_0 : i32, i32
  }
  func.func @transform_5(%arg0: i32) -> (i32, i32) {
    %c0_i32 = arith.constant 0 : i32
    %c0_i32_0 = arith.constant 0 : i32
    return %arg0, %c0_i32 : i32, i32
  }
}

</mosaic_0001>

<llo_original>
// kernel: tpu_custom_call.1
$region0: #{tpu_custom_call.1}
  #allocation0 [shape = 'u32[]', space=smem, size = 0x4, offset = 0x4, fixed_abs, tag = 'smem constant byte address 0x4 - core index']
  #allocation1 [shape = 'u32[144,128]{1,0:T(1,128)}', space=vmem, size = 0x12000, scoped, tag = 'internal scratch']
  %s0 = inlined_call_operand.vmem [shape: f32[8,8], index: 0, kind: input, shape index: {}]
  %s1 = inlined_call_operand.vmem [shape: f32[8,30], index: 1, kind: input, shape index: {}]
  %s2 = inlined_call_operand.vmem [shape: f32[1,30], index: 2, kind: input, shape index: {}]
  %s3 = inlined_call_operand.vmem [shape: f32[30,4], index: 3, kind: input, shape index: {}]
  %s4 = inlined_call_operand.vmem [shape: f32[1,4], index: 4, kind: input, shape index: {}]
  %s5 = inlined_call_operand.vmem [shape: f32[8,4], index: 5, kind: output, shape index: {}]
  %s6 = sld [smem:[#allocation0]]
  $region30: #{tpu_custom_call.1} parent=0
    _
  %s8 = ssub.s32 1, %s6
  %s9 = scalar_select 0, %s8, %s6
  // Predicated region
  $region2: #{tpu_custom_call.1} parent=0 // pred_check
    _
  $region3: #{tpu_custom_call.1} parent=0 // pred_check_branch
    %11 = sbr.rel (0) target = $region5
  $region4: #{tpu_custom_call.1} parent=0 // pred_region
    _
  $region5: #{tpu_custom_call.1} parent=0 // pred_fallthru
    _
  // Predicated region
  $region6: #{tpu_custom_call.1} parent=0 // pred_check
    _
  $region7: #{tpu_custom_call.1} parent=0 // pred_check_branch
    %13 = sbr.rel (0) target = $region9
  $region8: #{tpu_custom_call.1} parent=0 // pred_region
    _
  $region9: #{tpu_custom_call.1} parent=0 // pred_fallthru
    _
  // Predicated region
  $region10: #{tpu_custom_call.1} parent=0 // pred_check
    _
  $region11: #{tpu_custom_call.1} parent=0 // pred_check_branch
    %15 = sbr.rel (0) target = $region13
  $region12: #{tpu_custom_call.1} parent=0 // pred_region
    _
  $region13: #{tpu_custom_call.1} parent=0 // pred_fallthru
    _
  // Predicated region
  $region14: #{tpu_custom_call.1} parent=0 // pred_check
    _
  $region15: #{tpu_custom_call.1} parent=0 // pred_check_branch
    %17 = sbr.rel (0) target = $region17
  $region16: #{tpu_custom_call.1} parent=0 // pred_region
    _
  $region17: #{tpu_custom_call.1} parent=0 // pred_fallthru
    _
  // Predicated region
  $region18: #{tpu_custom_call.1} parent=0 // pred_check
    _
  $region19: #{tpu_custom_call.1} parent=0 // pred_check_branch
    %19 = sbr.rel (0) target = $region21
  $region20: #{tpu_custom_call.1} parent=0 // pred_region
    _
  $region21: #{tpu_custom_call.1} parent=0 // pred_fallthru
    _
  %v20 = vld [vmem:[%s0] sm:$0xff]
  %v21 = vld [vmem:[%s1] sm:$0xff]
  %v22 = vld [vmem:[%s2] sm:$0x1]
  %v24 = vlaneseq
  %v25 = vshrl.u32 %v24, 7
  %v26 = vsub.s32 0, %v25
  %v27 = vrot.slane %v22, %v26
  %vm29 = vcmask 64512
  %v31 = vsel %vm29, %v20, 0
  %33 = vmatprep.subr.mxu0 0.0
  %34 = vmatpush1.msra.mxu0 %v21
  %35 = vmatprep.subr.mxu0 0.0
  %36 = vmatpush1.msra.mxu0 0.0
  %37 = vmatprep.subr.mxu0 0.0
  %38 = vmatpush1.msra.mxu0 0.0
  %39 = vmatprep.subr.mxu0 0.0
  %40 = vmatpush1.msra.mxu0 0.0
  %41 = vmatprep.subr.mxu0 0.0
  %42 = vmatpush1.msra.mxu0 0.0
  %43 = vmatprep.subr.mxu0 0.0
  %44 = vmatpush1.msra.mxu0 0.0
  %45 = vmatprep.subr.mxu0 0.0
  %46 = vmatpush1.msra.mxu0 0.0
  %47 = vmatprep.subr.mxu0 0.0
  %48 = vmatpush1.msra.mxu0 0.0
  %49 = vmatprep.subr.mxu0 0.0
  %50 = vmatpush1.msra.mxu0 0.0
  %51 = vmatprep.subr.mxu0 0.0
  %52 = vmatpush1.msra.mxu0 0.0
  %53 = vmatprep.subr.mxu0 0.0
  %54 = vmatpush1.msra.mxu0 0.0
  %55 = vmatprep.subr.mxu0 0.0
  %56 = vmatpush1.msra.mxu0 0.0
  %57 = vmatprep.subr.mxu0 0.0
  %58 = vmatpush1.msra.mxu0 0.0
  %59 = vmatprep.subr.mxu0 0.0
  %60 = vmatpush1.msra.mxu0 0.0
  %61 = vmatprep.subr.mxu0 0.0
  %62 = vmatpush1.msra.mxu0 0.0
  %63 = vmatprep.subr.mxu0 0.0
  %64 = vmatpush1.msra.mxu0 0.0
  %65 = vmatprep.subr.mxu0 0.0
  %66 = vmatpush1.msra.mxu0 0.0
  %67 = vmatprep.subr.mxu0 0.0
  %68 = vmatpush1.msra.mxu0 0.0
  %69 = vmatprep.subr.mxu0 0.0
  %70 = vmatpush1.msra.mxu0 0.0
  %71 = vmatprep.subr.mxu0 0.0
  %72 = vmatpush1.msra.mxu0 0.0
  %73 = vmatprep.subr.mxu0 0.0
  %74 = vmatpush1.msra.mxu0 0.0
  %75 = vmatprep.subr.mxu0 0.0
  %76 = vmatpush1.msra.mxu0 0.0
  %77 = vmatprep.subr.mxu0 0.0
  %78 = vmatpush1.msra.mxu0 0.0
  %79 = vmatprep.subr.mxu0 0.0
  %80 = vmatpush1.msra.mxu0 0.0
  %81 = vmatprep.subr.mxu0 0.0
  %82 = vmatpush1.msra.mxu0 0.0
  %83 = vmatprep.subr.mxu0 0.0
  %84 = vmatpush1.msra.mxu0 0.0
  %85 = vmatprep.subr.mxu0 0.0
  %86 = vmatpush1.msra.mxu0 0.0
  %87 = vmatprep.subr.mxu0 0.0
  %88 = vmatpush1.msra.mxu0 0.0
  %89 = vmatprep.subr.mxu0 0.0
  %90 = vmatpush1.msra.mxu0 0.0
  %91 = vmatprep.subr.mxu0 0.0
  %92 = vmatpush1.msra.mxu0 0.0
  %93 = vmatprep.subr.mxu0 0.0
  %94 = vmatpush1.msra.mxu0 0.0
  %95 = vmatprep.subr.mxu0 0.0
  %96 = vmatpush1.msra.mxu0 0.0
  %97 = vmatprep.mubr.f32.mxu0 0.0
  %98 = vmatmul.mubr.f32.gmra.mrb[0].mxu0 %v31
  %v99 = vpop.f32.mrb[0].mxu0
  %v100 = vadd.f32 %v27, %v99
  %v101 = vpop.f32.mrb[0].mxu0
  %102 = vdwg.mxu0
  %v103 = vmax.f32 %v100, 0.0
  %v104 = vld [vmem:[%s3] sm:$0xff]
  %v105 = vld [vmem:[%s3 + $0x8] sm:$0xff]
  %v106 = vld [vmem:[%s3 + $0x10] sm:$0xff]
  %v107 = vld [vmem:[%s3 + $0x18] sm:$0x3f]
  %v108 = vld [vmem:[%s4] sm:$0x1]
  %v110 = vlaneseq
  %v111 = vshrl.u32 %v110, 7
  %v112 = vsub.s32 0, %v111
  %v113 = vrot.slane %v108, %v112
  %vm115 = vcmask 244736
  %v117 = vsel %vm115, %v103, 0
  %vm119 = vcmask 1045504
  %v121 = vsel %vm119, %v107, 0
  %123 = vmatprep.subr.mxu0 0.0
  %124 = vmatpush1.msra.mxu0 %v104
  %125 = vmatprep.subr.mxu0 0.0
  %126 = vmatpush1.msra.mxu0 %v105
  %127 = vmatprep.subr.mxu0 0.0
  %128 = vmatpush1.msra.mxu0 %v106
  %129 = vmatprep.subr.mxu0 0.0
  %130 = vmatpush1.msra.mxu0 %v121
  %131 = vmatprep.subr.mxu0 0.0
  %132 = vmatpush1.msra.mxu0 0.0
  %133 = vmatprep.subr.mxu0 0.0
  %134 = vmatpush1.msra.mxu0 0.0
  %135 = vmatprep.subr.mxu0 0.0
  %136 = vmatpush1.msra.mxu0 0.0
  %137 = vmatprep.subr.mxu0 0.0
  %138 = vmatpush1.msra.mxu0 0.0
  %139 = vmatprep.subr.mxu0 0.0
  %140 = vmatpush1.msra.mxu0 0.0
  %141 = vmatprep.subr.mxu0 0.0
  %142 = vmatpush1.msra.mxu0 0.0
  %143 = vmatprep.subr.mxu0 0.0
  %144 = vmatpush1.msra.mxu0 0.0
  %145 = vmatprep.subr.mxu0 0.0
  %146 = vmatpush1.msra.mxu0 0.0
  %147 = vmatprep.subr.mxu0 0.0
  %148 = vmatpush1.msra.mxu0 0.0
  %149 = vmatprep.subr.mxu0 0.0
  %150 = vmatpush1.msra.mxu0 0.0
  %151 = vmatprep.subr.mxu0 0.0
  %152 = vmatpush1.msra.mxu0 0.0
  %153 = vmatprep.subr.mxu0 0.0
  %154 = vmatpush1.msra.mxu0 0.0
  %155 = vmatprep.subr.mxu0 0.0
  %156 = vmatpush1.msra.mxu0 0.0
  %157 = vmatprep.subr.mxu0 0.0
  %158 = vmatpush1.msra.mxu0 0.0
  %159 = vmatprep.subr.mxu0 0.0
  %160 = vmatpush1.msra.mxu0 0.0
  %161 = vmatprep.subr.mxu0 0.0
  %162 = vmatpush1.msra.mxu0 0.0
  %163 = vmatprep.subr.mxu0 0.0
  %164 = vmatpush1.msra.mxu0 0.0
  %165 = vmatprep.subr.mxu0 0.0
  %166 = vmatpush1.msra.mxu0 0.0
  %167 = vmatprep.subr.mxu0 0.0
  %168 = vmatpush1.msra.mxu0 0.0
  %169 = vmatprep.subr.mxu0 0.0
  %170 = vmatpush1.msra.mxu0 0.0
  %171 = vmatprep.subr.mxu0 0.0
  %172 = vmatpush1.msra.mxu0 0.0
  %173 = vmatprep.subr.mxu0 0.0
  %174 = vmatpush1.msra.mxu0 0.0
  %175 = vmatprep.subr.mxu0 0.0
  %176 = vmatpush1.msra.mxu0 0.0
  %177 = vmatprep.subr.mxu0 0.0
  %178 = vmatpush1.msra.mxu0 0.0
  %179 = vmatprep.subr.mxu0 0.0
  %180 = vmatpush1.msra.mxu0 0.0
  %181 = vmatprep.subr.mxu0 0.0
  %182 = vmatpush1.msra.mxu0 0.0
  %183 = vmatprep.subr.mxu0 0.0
  %184 = vmatpush1.msra.mxu0 0.0
  %185 = vmatprep.subr.mxu0 0.0
  %186 = vmatpush1.msra.mxu0 0.0
  %187 = vmatprep.mubr.f32.mxu0 0.0
  %188 = vmatmul.mubr.f32.gmra.mrb[0].mxu0 %v117
  %v189 = vpop.f32.mrb[0].mxu0
  %v190 = vadd.f32 %v113, %v189
  %v191 = vpop.f32.mrb[0].mxu0
  %192 = vdwg.mxu0
  %vm193 = vcmask 31744
  %194 = vst.msk [vmem:[%s5] sm:$0xff] %vm193, %v190
  // Predicated region
  $region22: #{tpu_custom_call.1} parent=0 // pred_check
    _
  $region23: #{tpu_custom_call.1} parent=0 // pred_check_branch
    %196 = sbr.rel (0) target = $region25
  $region24: #{tpu_custom_call.1} parent=0 // pred_region
    _
  $region25: #{tpu_custom_call.1} parent=0 // pred_fallthru
    _
  // Predicated region
  $region26: #{tpu_custom_call.1} parent=0 // pred_check
    _
  $region27: #{tpu_custom_call.1} parent=0 // pred_check_branch
    %198 = sbr.rel (0) target = $region29
  $region28: #{tpu_custom_call.1} parent=0 // pred_region
    _
  $region29: #{tpu_custom_call.1} parent=0 // pred_fallthru
    _

</llo_original>
